<compile_context>
chip_gen: v7x
topology: tpu7x:2x2x1
jax: 0.10.0
libtpu: 0.0.40
codegen_flags: <defaults>
</compile_context>

<pallas_src>
import jax
import jax.numpy as jnp
from jax.experimental import pallas as pl
from jax.experimental.pallas import tpu as pltpu

INPUT_DIM = 384
OUTPUT_DIM = 512


def _linear_kernel(x_ref, w_ref, b_ref, o_ref):
    # x_ref: (TM, K)  w_ref: (K, N)  b_ref: (1, N)  o_ref: (TM, N)
    acc = jnp.dot(x_ref[...], w_ref[...], preferred_element_type=jnp.float32)
    o_ref[...] = (acc + b_ref[...]).astype(o_ref.dtype)


def _pick_tm(M):
    """Largest row tile (multiple of 8, <=1024) that divides M; else full M."""
    if M <= 1024:
        return M
    for t in (1024, 512, 256, 128, 64, 32, 16, 8):
        if M % t == 0:
            return t
    return M  # ragged M: fall back to a single full block


def vision_projection(x, w_t, b, *, tm=None, param_dtype=None, out_dtype=None):
    """y = x @ w_t + b  (equivalent to torch nn.Linear with weight = w_t.T).

    x:   (M, K)  w_t: (K, N) (PyTorch weight transposed)  b: (N,)
    param_dtype: optional compute dtype for x/w (e.g. jnp.bfloat16); the
                 matmul still accumulates in f32 and the bias is added in f32.
    """
    M, K = x.shape
    K2, N = w_t.shape
    assert K == K2
    if out_dtype is None:
        out_dtype = x.dtype
    if param_dtype is not None:
        x = x.astype(param_dtype)
        w_t = w_t.astype(param_dtype)
    b2 = b.reshape(1, N).astype(jnp.float32)  # added on the f32 accumulator

    if tm is None:
        tm = _pick_tm(M)

    if tm == M:
        # Whole problem fits comfortably in VMEM: no grid, no pipelining.
        return pl.pallas_call(
            _linear_kernel,
            out_shape=jax.ShapeDtypeStruct((M, N), out_dtype),
            in_specs=[pl.BlockSpec(memory_space=pltpu.MemorySpace.VMEM)] * 3,
            out_specs=pl.BlockSpec(memory_space=pltpu.MemorySpace.VMEM),
        )(x, w_t, b2)

    assert M % tm == 0 and tm % 8 == 0, "tm must divide M and be a multiple of 8"
    grid = (M // tm,)
    return pl.pallas_call(
        _linear_kernel,
        out_shape=jax.ShapeDtypeStruct((M, N), out_dtype),
        grid_spec=pl.GridSpec(
            grid=grid,
            in_specs=[
                pl.BlockSpec((tm, K), lambda i: (i, 0)),  # x row tile
                pl.BlockSpec((K, N), lambda i: (0, 0)),   # weight: resident, contiguous
                pl.BlockSpec((1, N), lambda i: (0, 0)),   # bias: resident, full width
            ],
            out_specs=pl.BlockSpec((tm, N), lambda i: (i, 0)),  # lane-dense store
        ),
        compiler_params=pltpu.CompilerParams(
            # M axis parallel -> megacore / v7x dual-TC row split.
            dimension_semantics=("parallel",)
        ),
    )(x, w_t, b2)


if __name__ == "__main__":
    key = jax.random.PRNGKey(0)
    k_x, k_w, k_b, k_x2 = jax.random.split(key, 4)

    # Deterministic "parameter init" (synthetic, roughly Linear-like scale).
    w_t = jax.random.normal(k_w, (INPUT_DIM, OUTPUT_DIM), jnp.float32) * (
        1.0 / jnp.sqrt(INPUT_DIM)
    )
    b = jax.random.normal(k_b, (OUTPUT_DIM,), jnp.float32) * 0.01

    # --- Small batch: single grid-less invocation, everything in VMEM. ---
    batch = 8
    vision_embeds = jax.random.normal(k_x, (batch, INPUT_DIM), jnp.float32)
    out = jax.block_until_ready(vision_projection(vision_embeds, w_t, b))
    ref = vision_embeds @ w_t + b
    assert out.shape == (batch, OUTPUT_DIM)
    assert jnp.allclose(out, ref, atol=1e-4, rtol=1e-4)

    # --- Larger token count: M-tiled grid path, weight stays VMEM-resident. ---
    tokens = 256
    x_big = jax.random.normal(k_x2, (tokens, INPUT_DIM), jnp.float32)
    out_big = jax.block_until_ready(vision_projection(x_big, w_t, b, tm=128))
    ref_big = x_big @ w_t + b
    assert out_big.shape == (tokens, OUTPUT_DIM)
    assert jnp.allclose(out_big, ref_big, atol=1e-4, rtol=1e-4)

    # --- bf16 weight/activation path (f32 accumulation), loose tolerance. ---
    out_bf16 = jax.block_until_ready(
        vision_projection(vision_embeds, w_t, b, param_dtype=jnp.bfloat16)
    )
    assert out_bf16.shape == (batch, OUTPUT_DIM)
    assert jnp.all(jnp.isfinite(out_bf16))
    assert jnp.allclose(out_bf16, ref, atol=1e-1, rtol=0.0)

    print("KERNEL_OK")
</pallas_src>

<mosaic_0001>
module attributes {stable_mosaic.version = 11 : i64} {
  func.func @_linear_kernel(%arg0: memref<8x384xf32, #tpu.memory_space<vmem>>, %arg1: memref<384x512xf32, #tpu.memory_space<vmem>>, %arg2: memref<1x512xf32, #tpu.memory_space<vmem>>, %arg3: memref<8x512xf32, #tpu.memory_space<vmem>>) attributes {dimension_semantics = [], scalar_prefetch = 0 : i64, scratch_operands = 0 : i64, tpu.core_type = #tpu.core_type<tc>} {
    %c0 = arith.constant 0 : index
    %c0_0 = arith.constant 0 : index
    %0 = vector.load %arg0[%c0, %c0_0] : memref<8x384xf32, #tpu.memory_space<vmem>>, vector<8x384xf32>
    %c0_1 = arith.constant 0 : index
    %c0_2 = arith.constant 0 : index
    %1 = vector.load %arg1[%c0_1, %c0_2] : memref<384x512xf32, #tpu.memory_space<vmem>>, vector<384x512xf32>
    %cst = arith.constant dense<0.000000e+00> : vector<8x512xf32>
    %2 = tpu.matmul %0, %1, %cst {dimension_numbers = #tpu.dot_dimension_numbers<[1], [0], [0], [1], [0, 0, 1, 1], [], []>} : vector<8x384xf32>, vector<384x512xf32>, vector<8x512xf32> -> vector<8x512xf32>
    %c0_3 = arith.constant 0 : index
    %c0_4 = arith.constant 0 : index
    %3 = vector.load %arg2[%c0_3, %c0_4] : memref<1x512xf32, #tpu.memory_space<vmem>>, vector<1x512xf32>
    %4 = vector.broadcast %3 : vector<1x512xf32> to vector<8x512xf32>
    %5 = arith.addf %2, %4 : vector<8x512xf32>
    %c0_5 = arith.constant 0 : index
    %c0_6 = arith.constant 0 : index
    %6 = vector.load %arg3[%c0_5, %c0_6] : memref<8x512xf32, #tpu.memory_space<vmem>>, vector<8x512xf32>
    tpu.vector_store %arg3[%c0_5, %c0_6], %5 {strides = array<i32>} : memref<8x512xf32, #tpu.memory_space<vmem>>, vector<8x512xf32>,
    return
  }
}

</mosaic_0001>

<llo_original>
// kernel: tpu_custom_call.1
$region0: #{tpu_custom_call.1}
  #allocation0 [shape = 'u32[]', space=smem, size = 0x4, offset = 0x4, fixed_abs, tag = 'smem constant byte address 0x4 - core index']
  #allocation1 [shape = 'u32[144,128]{1,0:T(1,128)}', space=vmem, size = 0x12000, scoped, tag = 'internal scratch']
  %s0 = inlined_call_operand.hbm [shape: f32[8,384], index: 0, kind: input, shape index: {}]
  %s1 = inlined_call_operand.hbm [shape: f32[384,512], index: 1, kind: input, shape index: {}]
  %s2 = inlined_call_operand.vmem [shape: f32[1,512], index: 2, kind: input, shape index: {}]
  %s3 = inlined_call_operand.hbm [shape: f32[8,512], index: 3, kind: output, shape index: {}]
  %s4 = sld [smem:[#allocation0]]
  $region30: #{tpu_custom_call.1} parent=0
    _
  %s6 = ssub.s32 1, %s4
  %s7 = scalar_select 0, %s6, %s4
  $region1: #{tpu_custom_call.1} parent=0
    #allocation2 [shape = 'u8[12288]{0}', space=vmem, size = 0x3000, scoped, tag = 'input window, operand 0, single buffered']
    #allocation3 [shape = 's32[1]{0}', space=sflag, size = 0x4, scoped, tag = 'scoped memory for tpu_custom_call.1']
    #allocation4 [shape = 's32[1]{0}', space=sflag, size = 0x4, scoped, tag = 'scoped memory for tpu_custom_call.1']
    #allocation5 [shape = 'u8[786432]{0}', space=vmem, size = 0xc0000, scoped, tag = 'input window, operand 1, single buffered']
    #allocation6 [shape = 's32[1]{0}', space=sflag, size = 0x4, scoped, tag = 'scoped memory for tpu_custom_call.1']
    #allocation7 [shape = 'u8[16384]{0}', space=vmem, size = 0x4000, scoped, tag = 'output window, operand 0, single buffered']
    %8 = vsyncpa [#allocation3], 0
    %9 = vsyncpa [#allocation6], 0
    %10 = vsyncpa [#allocation4], 0
    // Predicated region
    $region2: #{tpu_custom_call.1} parent=1 // pred_check
      _
    $region3: #{tpu_custom_call.1} parent=1 // pred_check_branch
      %12 = sbr.rel (0) target = $region5
    $region4: #{tpu_custom_call.1} parent=1 // pred_region
      %s14 = ssub.s32 384, 384
      %15 = vsyncadd [#allocation3], %s14
      %s17 = sshll.u32 [#allocation2], 4
      %s18 = int_to_ptr.vmem [resolvable:$true] %s17
      %20 = dma.hbm_to_vmem [thread:$0]  %s0, 384, %s18, [#allocation3]
    $region5: #{tpu_custom_call.1} parent=1 // pred_fallthru
      _
    // Predicated region
    $region6: #{tpu_custom_call.1} parent=1 // pred_check
      _
    $region7: #{tpu_custom_call.1} parent=1 // pred_check_branch
      %22 = sbr.rel (0) target = $region9
    $region8: #{tpu_custom_call.1} parent=1 // pred_region
      %s24 = ssub.s32 24576, 24576
      %25 = vsyncadd [#allocation6], %s24
      %s26 = sshll.u32 [#allocation5], 4
      %s27 = int_to_ptr.vmem [resolvable:$true] %s26
      %32 = dma.hbm_to_vmem [thread:$0]  %s1, 24576, %s27, [#allocation6], 512, 512, 32
    $region9: #{tpu_custom_call.1} parent=1 // pred_fallthru
      _
    // Predicated region
    $region10: #{tpu_custom_call.1} parent=1 // pred_check
      _
    $region11: #{tpu_custom_call.1} parent=1 // pred_check_branch
      %34 = sbr.rel (0) target = $region13
    $region12: #{tpu_custom_call.1} parent=1 // pred_region
      _
    $region13: #{tpu_custom_call.1} parent=1 // pred_fallthru
      _
    // Predicated region
    $region14: #{tpu_custom_call.1} parent=1 // pred_check
      _
    $region15: #{tpu_custom_call.1} parent=1 // pred_check_branch
      %36 = sbr.rel (0) target = $region17
    $region16: #{tpu_custom_call.1} parent=1 // pred_region
      %37 = dma.done [#allocation3], 384
    $region17: #{tpu_custom_call.1} parent=1 // pred_fallthru
      _
    // Predicated region
    $region18: #{tpu_custom_call.1} parent=1 // pred_check
      _
    $region19: #{tpu_custom_call.1} parent=1 // pred_check_branch
      %39 = sbr.rel (0) target = $region21
    $region20: #{tpu_custom_call.1} parent=1 // pred_region
      %40 = dma.done [#allocation6], 24576
    $region21: #{tpu_custom_call.1} parent=1 // pred_fallthru
      _
    %v41 = vld [vmem:[#allocation2] sm:$0xff]
    %v42 = vld [vmem:[#allocation2 + $0x8] sm:$0xff]
    %v43 = vld [vmem:[#allocation2 + $0x10] sm:$0xff]
    %v44 = vld [vmem:[#allocation5] sm:$0xff]
    %v45 = vld [vmem:[#allocation5 + $0x8] sm:$0xff]
    %v46 = vld [vmem:[#allocation5 + $0x10] sm:$0xff]
    %v47 = vld [vmem:[#allocation5 + $0x18] sm:$0xff]
    %v48 = vld [vmem:[#allocation5 + $0x20] sm:$0xff]
    %v49 = vld [vmem:[#allocation5 + $0x28] sm:$0xff]
    %v50 = vld [vmem:[#allocation5 + $0x30] sm:$0xff]
    %v51 = vld [vmem:[#allocation5 + $0x38] sm:$0xff]
    %v52 = vld [vmem:[#allocation5 + $0x40] sm:$0xff]
    %v53 = vld [vmem:[#allocation5 + $0x48] sm:$0xff]
    %v54 = vld [vmem:[#allocation5 + $0x50] sm:$0xff]
    %v55 = vld [vmem:[#allocation5 + $0x58] sm:$0xff]
    %v56 = vld [vmem:[#allocation5 + $0x60] sm:$0xff]
    %v57 = vld [vmem:[#allocation5 + $0x68] sm:$0xff]
    %v58 = vld [vmem:[#allocation5 + $0x70] sm:$0xff]
    %v59 = vld [vmem:[#allocation5 + $0x78] sm:$0xff]
    %v60 = vld [vmem:[#allocation5 + $0x80] sm:$0xff]
    %v61 = vld [vmem:[#allocation5 + $0x88] sm:$0xff]
    %v62 = vld [vmem:[#allocation5 + $0x90] sm:$0xff]
    %v63 = vld [vmem:[#allocation5 + $0x98] sm:$0xff]
    %v64 = vld [vmem:[#allocation5 + $0xa0] sm:$0xff]
    %v65 = vld [vmem:[#allocation5 + $0xa8] sm:$0xff]
    %v66 = vld [vmem:[#allocation5 + $0xb0] sm:$0xff]
    %v67 = vld [vmem:[#allocation5 + $0xb8] sm:$0xff]
    %v68 = vld [vmem:[#allocation5 + $0xc0] sm:$0xff]
    %v69 = vld [vmem:[#allocation5 + $0xc8] sm:$0xff]
    %v70 = vld [vmem:[#allocation5 + $0xd0] sm:$0xff]
    %v71 = vld [vmem:[#allocation5 + $0xd8] sm:$0xff]
    %v72 = vld [vmem:[#allocation5 + $0xe0] sm:$0xff]
    %v73 = vld [vmem:[#allocation5 + $0xe8] sm:$0xff]
    %v74 = vld [vmem:[#allocation5 + $0xf0] sm:$0xff]
    %v75 = vld [vmem:[#allocation5 + $0xf8] sm:$0xff]
    %v76 = vld [vmem:[#allocation5 + $0x100] sm:$0xff]
    %v77 = vld [vmem:[#allocation5 + $0x108] sm:$0xff]
    %v78 = vld [vmem:[#allocation5 + $0x110] sm:$0xff]
    %v79 = vld [vmem:[#allocation5 + $0x118] sm:$0xff]
    %v80 = vld [vmem:[#allocation5 + $0x120] sm:$0xff]
    %v81 = vld [vmem:[#allocation5 + $0x128] sm:$0xff]
    %v82 = vld [vmem:[#allocation5 + $0x130] sm:$0xff]
    %v83 = vld [vmem:[#allocation5 + $0x138] sm:$0xff]
    %v84 = vld [vmem:[#allocation5 + $0x140] sm:$0xff]
    %v85 = vld [vmem:[#allocation5 + $0x148] sm:$0xff]
    %v86 = vld [vmem:[#allocation5 + $0x150] sm:$0xff]
    %v87 = vld [vmem:[#allocation5 + $0x158] sm:$0xff]
    %v88 = vld [vmem:[#allocation5 + $0x160] sm:$0xff]
    %v89 = vld [vmem:[#allocation5 + $0x168] sm:$0xff]
    %v90 = vld [vmem:[#allocation5 + $0x170] sm:$0xff]
    %v91 = vld [vmem:[#allocation5 + $0x178] sm:$0xff]
    %v92 = vld [vmem:[#allocation5 + $0x180] sm:$0xff]
    %v93 = vld [vmem:[#allocation5 + $0x188] sm:$0xff]
    %v94 = vld [vmem:[#allocation5 + $0x190] sm:$0xff]
    %v95 = vld [vmem:[#allocation5 + $0x198] sm:$0xff]
    %v96 = vld [vmem:[#allocation5 + $0x1a0] sm:$0xff]
    %v97 = vld [vmem:[#allocation5 + $0x1a8] sm:$0xff]
    %v98 = vld [vmem:[#allocation5 + $0x1b0] sm:$0xff]
    %v99 = vld [vmem:[#allocation5 + $0x1b8] sm:$0xff]
    %v100 = vld [vmem:[#allocation5 + $0x1c0] sm:$0xff]
    %v101 = vld [vmem:[#allocation5 + $0x1c8] sm:$0xff]
    %v102 = vld [vmem:[#allocation5 + $0x1d0] sm:$0xff]
    %v103 = vld [vmem:[#allocation5 + $0x1d8] sm:$0xff]
    %v104 = vld [vmem:[#allocation5 + $0x1e0] sm:$0xff]
    %v105 = vld [vmem:[#allocation5 + $0x1e8] sm:$0xff]
    %v106 = vld [vmem:[#allocation5 + $0x1f0] sm:$0xff]
    %v107 = vld [vmem:[#allocation5 + $0x1f8] sm:$0xff]
    %v108 = vld [vmem:[#allocation5 + $0x200] sm:$0xff]
    %v109 = vld [vmem:[#allocation5 + $0x208] sm:$0xff]
    %v110 = vld [vmem:[#allocation5 + $0x210] sm:$0xff]
    %v111 = vld [vmem:[#allocation5 + $0x218] sm:$0xff]
    %v112 = vld [vmem:[#allocation5 + $0x220] sm:$0xff]
    %v113 = vld [vmem:[#allocation5 + $0x228] sm:$0xff]
    %v114 = vld [vmem:[#allocation5 + $0x230] sm:$0xff]
    %v115 = vld [vmem:[#allocation5 + $0x238] sm:$0xff]
    %v116 = vld [vmem:[#allocation5 + $0x240] sm:$0xff]
    %v117 = vld [vmem:[#allocation5 + $0x248] sm:$0xff]
    %v118 = vld [vmem:[#allocation5 + $0x250] sm:$0xff]
    %v119 = vld [vmem:[#allocation5 + $0x258] sm:$0xff]
    %v120 = vld [vmem:[#allocation5 + $0x260] sm:$0xff]
    %v121 = vld [vmem:[#allocation5 + $0x268] sm:$0xff]
    %v122 = vld [vmem:[#allocation5 + $0x270] sm:$0xff]
    %v123 = vld [vmem:[#allocation5 + $0x278] sm:$0xff]
    %v124 = vld [vmem:[#allocation5 + $0x280] sm:$0xff]
    %v125 = vld [vmem:[#allocation5 + $0x288] sm:$0xff]
    %v126 = vld [vmem:[#allocation5 + $0x290] sm:$0xff]
    %v127 = vld [vmem:[#allocation5 + $0x298] sm:$0xff]
    %v128 = vld [vmem:[#allocation5 + $0x2a0] sm:$0xff]
    %v129 = vld [vmem:[#allocation5 + $0x2a8] sm:$0xff]
    %v130 = vld [vmem:[#allocation5 + $0x2b0] sm:$0xff]
    %v131 = vld [vmem:[#allocation5 + $0x2b8] sm:$0xff]
    %v132 = vld [vmem:[#allocation5 + $0x2c0] sm:$0xff]
    %v133 = vld [vmem:[#allocation5 + $0x2c8] sm:$0xff]
    %v134 = vld [vmem:[#allocation5 + $0x2d0] sm:$0xff]
    %v135 = vld [vmem:[#allocation5 + $0x2d8] sm:$0xff]
    %v136 = vld [vmem:[#allocation5 + $0x2e0] sm:$0xff]
    %v137 = vld [vmem:[#allocation5 + $0x2e8] sm:$0xff]
    %v138 = vld [vmem:[#allocation5 + $0x2f0] sm:$0xff]
    %v139 = vld [vmem:[#allocation5 + $0x2f8] sm:$0xff]
    %v140 = vld [vmem:[#allocation5 + $0x300] sm:$0xff]
    %v141 = vld [vmem:[#allocation5 + $0x308] sm:$0xff]
    %v142 = vld [vmem:[#allocation5 + $0x310] sm:$0xff]
    %v143 = vld [vmem:[#allocation5 + $0x318] sm:$0xff]
    %v144 = vld [vmem:[#allocation5 + $0x320] sm:$0xff]
    %v145 = vld [vmem:[#allocation5 + $0x328] sm:$0xff]
    %v146 = vld [vmem:[#allocation5 + $0x330] sm:$0xff]
    %v147 = vld [vmem:[#allocation5 + $0x338] sm:$0xff]
    %v148 = vld [vmem:[#allocation5 + $0x340] sm:$0xff]
    %v149 = vld [vmem:[#allocation5 + $0x348] sm:$0xff]
    %v150 = vld [vmem:[#allocation5 + $0x350] sm:$0xff]
    %v151 = vld [vmem:[#allocation5 + $0x358] sm:$0xff]
    %v152 = vld [vmem:[#allocation5 + $0x360] sm:$0xff]
    %v153 = vld [vmem:[#allocation5 + $0x368] sm:$0xff]
    %v154 = vld [vmem:[#allocation5 + $0x370] sm:$0xff]
    %v155 = vld [vmem:[#allocation5 + $0x378] sm:$0xff]
    %v156 = vld [vmem:[#allocation5 + $0x380] sm:$0xff]
    %v157 = vld [vmem:[#allocation5 + $0x388] sm:$0xff]
    %v158 = vld [vmem:[#allocation5 + $0x390] sm:$0xff]
    %v159 = vld [vmem:[#allocation5 + $0x398] sm:$0xff]
    %v160 = vld [vmem:[#allocation5 + $0x3a0] sm:$0xff]
    %v161 = vld [vmem:[#allocation5 + $0x3a8] sm:$0xff]
    %v162 = vld [vmem:[#allocation5 + $0x3b0] sm:$0xff]
    %v163 = vld [vmem:[#allocation5 + $0x3b8] sm:$0xff]
    %v164 = vld [vmem:[#allocation5 + $0x3c0] sm:$0xff]
    %v165 = vld [vmem:[#allocation5 + $0x3c8] sm:$0xff]
    %v166 = vld [vmem:[#allocation5 + $0x3d0] sm:$0xff]
    %v167 = vld [vmem:[#allocation5 + $0x3d8] sm:$0xff]
    %v168 = vld [vmem:[#allocation5 + $0x3e0] sm:$0xff]
    %v169 = vld [vmem:[#allocation5 + $0x3e8] sm:$0xff]
    %v170 = vld [vmem:[#allocation5 + $0x3f0] sm:$0xff]
    %v171 = vld [vmem:[#allocation5 + $0x3f8] sm:$0xff]
    %v172 = vld [vmem:[#allocation5 + $0x400] sm:$0xff]
    %v173 = vld [vmem:[#allocation5 + $0x408] sm:$0xff]
    %v174 = vld [vmem:[#allocation5 + $0x410] sm:$0xff]
    %v175 = vld [vmem:[#allocation5 + $0x418] sm:$0xff]
    %v176 = vld [vmem:[#allocation5 + $0x420] sm:$0xff]
    %v177 = vld [vmem:[#allocation5 + $0x428] sm:$0xff]
    %v178 = vld [vmem:[#allocation5 + $0x430] sm:$0xff]
    %v179 = vld [vmem:[#allocation5 + $0x438] sm:$0xff]
    %v180 = vld [vmem:[#allocation5 + $0x440] sm:$0xff]
    %v181 = vld [vmem:[#allocation5 + $0x448] sm:$0xff]
    %v182 = vld [vmem:[#allocation5 + $0x450] sm:$0xff]
    %v183 = vld [vmem:[#allocation5 + $0x458] sm:$0xff]
    %v184 = vld [vmem:[#allocation5 + $0x460] sm:$0xff]
    %v185 = vld [vmem:[#allocation5 + $0x468] sm:$0xff]
    %v186 = vld [vmem:[#allocation5 + $0x470] sm:$0xff]
    %v187 = vld [vmem:[#allocation5 + $0x478] sm:$0xff]
    %v188 = vld [vmem:[#allocation5 + $0x480] sm:$0xff]
    %v189 = vld [vmem:[#allocation5 + $0x488] sm:$0xff]
    %v190 = vld [vmem:[#allocation5 + $0x490] sm:$0xff]
    %v191 = vld [vmem:[#allocation5 + $0x498] sm:$0xff]
    %v192 = vld [vmem:[#allocation5 + $0x4a0] sm:$0xff]
    %v193 = vld [vmem:[#allocation5 + $0x4a8] sm:$0xff]
    %v194 = vld [vmem:[#allocation5 + $0x4b0] sm:$0xff]
    %v195 = vld [vmem:[#allocation5 + $0x4b8] sm:$0xff]
    %v196 = vld [vmem:[#allocation5 + $0x4c0] sm:$0xff]
    %v197 = vld [vmem:[#allocation5 + $0x4c8] sm:$0xff]
    %v198 = vld [vmem:[#allocation5 + $0x4d0] sm:$0xff]
    %v199 = vld [vmem:[#allocation5 + $0x4d8] sm:$0xff]
    %v200 = vld [vmem:[#allocation5 + $0x4e0] sm:$0xff]
    %v201 = vld [vmem:[#allocation5 + $0x4e8] sm:$0xff]
    %v202 = vld [vmem:[#allocation5 + $0x4f0] sm:$0xff]
    %v203 = vld [vmem:[#allocation5 + $0x4f8] sm:$0xff]
    %v204 = vld [vmem:[#allocation5 + $0x500] sm:$0xff]
    %v205 = vld [vmem:[#allocation5 + $0x508] sm:$0xff]
    %v206 = vld [vmem:[#allocation5 + $0x510] sm:$0xff]
    %v207 = vld [vmem:[#allocation5 + $0x518] sm:$0xff]
    %v208 = vld [vmem:[#allocation5 + $0x520] sm:$0xff]
    %v209 = vld [vmem:[#allocation5 + $0x528] sm:$0xff]
    %v210 = vld [vmem:[#allocation5 + $0x530] sm:$0xff]
    %v211 = vld [vmem:[#allocation5 + $0x538] sm:$0xff]
    %v212 = vld [vmem:[#allocation5 + $0x540] sm:$0xff]
    %v213 = vld [vmem:[#allocation5 + $0x548] sm:$0xff]
    %v214 = vld [vmem:[#allocation5 + $0x550] sm:$0xff]
    %v215 = vld [vmem:[#allocation5 + $0x558] sm:$0xff]
    %v216 = vld [vmem:[#allocation5 + $0x560] sm:$0xff]
    %v217 = vld [vmem:[#allocation5 + $0x568] sm:$0xff]
    %v218 = vld [vmem:[#allocation5 + $0x570] sm:$0xff]
    %v219 = vld [vmem:[#allocation5 + $0x578] sm:$0xff]
    %v220 = vld [vmem:[#allocation5 + $0x580] sm:$0xff]
    %v221 = vld [vmem:[#allocation5 + $0x588] sm:$0xff]
    %v222 = vld [vmem:[#allocation5 + $0x590] sm:$0xff]
    %v223 = vld [vmem:[#allocation5 + $0x598] sm:$0xff]
    %v224 = vld [vmem:[#allocation5 + $0x5a0] sm:$0xff]
    %v225 = vld [vmem:[#allocation5 + $0x5a8] sm:$0xff]
    %v226 = vld [vmem:[#allocation5 + $0x5b0] sm:$0xff]
    %v227 = vld [vmem:[#allocation5 + $0x5b8] sm:$0xff]
    %v228 = vld [vmem:[#allocation5 + $0x5c0] sm:$0xff]
    %v229 = vld [vmem:[#allocation5 + $0x5c8] sm:$0xff]
    %v230 = vld [vmem:[#allocation5 + $0x5d0] sm:$0xff]
    %v231 = vld [vmem:[#allocation5 + $0x5d8] sm:$0xff]
    %v232 = vld [vmem:[#allocation5 + $0x5e0] sm:$0xff]
    %v233 = vld [vmem:[#allocation5 + $0x5e8] sm:$0xff]
    %v234 = vld [vmem:[#allocation5 + $0x5f0] sm:$0xff]
    %v235 = vld [vmem:[#allocation5 + $0x5f8] sm:$0xff]
    %v236 = vld [vmem:[%s2] sm:$0xf]
    %v238 = vlaneseq
    %v239 = vshrl.u32 %v238, 7
    %v240 = vsub.s32 0, %v239
    %v241 = vrot.slane %v236, %v240
    %v242 = vlaneseq
    %v243 = vshrl.u32 %v242, 7
    %v244 = vsub.s32 1, %v243
    %v245 = vrot.slane %v236, %v244
    %v246 = vlaneseq
    %v247 = vshrl.u32 %v246, 7
    %v248 = vsub.s32 2, %v247
    %v249 = vrot.slane %v236, %v248
    %v250 = vlaneseq
    %v251 = vshrl.u32 %v250, 7
    %v252 = vsub.s32 3, %v251
    %v253 = vrot.slane %v236, %v252
    %258 = vmatprep.subr.mxu0 %v45
    %259 = vmatpush1.msra.mxu0 %v44
    %260 = vmatprep.subr.mxu0 %v49
    %261 = vmatpush1.msra.mxu0 %v48
    %262 = vmatprep.subr.mxu0 %v53
    %263 = vmatpush1.msra.mxu0 %v52
    %264 = vmatprep.subr.mxu0 %v57
    %265 = vmatpush1.msra.mxu0 %v56
    %266 = vmatprep.subr.mxu0 %v61
    %267 = vmatpush1.msra.mxu0 %v60
    %268 = vmatprep.subr.mxu0 %v65
    %269 = vmatpush1.msra.mxu0 %v64
    %270 = vmatprep.subr.mxu0 %v69
    %271 = vmatpush1.msra.mxu0 %v68
    %272 = vmatprep.subr.mxu0 %v73
    %273 = vmatpush1.msra.mxu0 %v72
    %274 = vmatprep.subr.mxu0 %v77
    %275 = vmatpush1.msra.mxu0 %v76
    %276 = vmatprep.subr.mxu0 %v81
    %277 = vmatpush1.msra.mxu0 %v80
    %278 = vmatprep.subr.mxu0 %v85
    %279 = vmatpush1.msra.mxu0 %v84
    %280 = vmatprep.subr.mxu0 %v89
    %281 = vmatpush1.msra.mxu0 %v88
    %282 = vmatprep.subr.mxu0 %v93
    %283 = vmatpush1.msra.mxu0 %v92
    %284 = vmatprep.subr.mxu0 %v97
    %285 = vmatpush1.msra.mxu0 %v96
    %286 = vmatprep.subr.mxu0 %v101
    %287 = vmatpush1.msra.mxu0 %v100
    %288 = vmatprep.subr.mxu0 %v105
    %289 = vmatpush1.msra.mxu0 %v104
    %290 = vmatprep.subr.mxu0 %v109
    %291 = vmatpush1.msra.mxu0 %v108
    %292 = vmatprep.subr.mxu0 %v113
    %293 = vmatpush1.msra.mxu0 %v112
    %294 = vmatprep.subr.mxu0 %v117
    %295 = vmatpush1.msra.mxu0 %v116
    %296 = vmatprep.subr.mxu0 %v121
    %297 = vmatpush1.msra.mxu0 %v120
    %298 = vmatprep.subr.mxu0 %v125
    %299 = vmatpush1.msra.mxu0 %v124
    %300 = vmatprep.subr.mxu0 %v129
    %301 = vmatpush1.msra.mxu0 %v128
    %302 = vmatprep.subr.mxu0 %v133
    %303 = vmatpush1.msra.mxu0 %v132
    %304 = vmatprep.subr.mxu0 %v137
    %305 = vmatpush1.msra.mxu0 %v136
    %306 = vmatprep.subr.mxu0 %v141
    %307 = vmatpush1.msra.mxu0 %v140
    %308 = vmatprep.subr.mxu0 %v145
    %309 = vmatpush1.msra.mxu0 %v144
    %310 = vmatprep.subr.mxu0 %v149
    %311 = vmatpush1.msra.mxu0 %v148
    %312 = vmatprep.subr.mxu0 %v153
    %313 = vmatpush1.msra.mxu0 %v152
    %314 = vmatprep.subr.mxu0 %v157
    %315 = vmatpush1.msra.mxu0 %v156
    %316 = vmatprep.subr.mxu0 %v161
    %317 = vmatpush1.msra.mxu0 %v160
    %318 = vmatprep.subr.mxu0 %v165
    %319 = vmatpush1.msra.mxu0 %v164
    %320 = vmatprep.subr.mxu0 %v169
    %321 = vmatpush1.msra.mxu0 %v168
    %322 = vmatprep.mubr.f32.mxu0 %v42
    %323 = vmatmul.mubr.f32.gmra.mrb[0].mxu0 %v41
    %v324 = vpop.f32.mrb[0].mxu0
    %v325 = vadd.f32 %v241, %v324
    %v326 = vpop.f32.mrb[0].mxu0
    %v327 = vadd.f32 %v245, %v326
    %328 = vdwg.mxu0
    %329 = vmatprep.subr.mxu0 %v173
    %330 = vmatpush1.msra.mxu0 %v172
    %331 = vmatprep.subr.mxu0 %v177
    %332 = vmatpush1.msra.mxu0 %v176
    %333 = vmatprep.subr.mxu0 %v181
    %334 = vmatpush1.msra.mxu0 %v180
    %335 = vmatprep.subr.mxu0 %v185
    %336 = vmatpush1.msra.mxu0 %v184
    %337 = vmatprep.subr.mxu0 %v189
    %338 = vmatpush1.msra.mxu0 %v188
    %339 = vmatprep.subr.mxu0 %v193
    %340 = vmatpush1.msra.mxu0 %v192
    %341 = vmatprep.subr.mxu0 %v197
    %342 = vmatpush1.msra.mxu0 %v196
    %343 = vmatprep.subr.mxu0 %v201
    %344 = vmatpush1.msra.mxu0 %v200
    %345 = vmatprep.subr.mxu0 %v205
    %346 = vmatpush1.msra.mxu0 %v204
    %347 = vmatprep.subr.mxu0 %v209
    %348 = vmatpush1.msra.mxu0 %v208
    %349 = vmatprep.subr.mxu0 %v213
    %350 = vmatpush1.msra.mxu0 %v212
    %351 = vmatprep.subr.mxu0 %v217
    %352 = vmatpush1.msra.mxu0 %v216
    %353 = vmatprep.subr.mxu0 %v221
    %354 = vmatpush1.msra.mxu0 %v220
    %355 = vmatprep.subr.mxu0 %v225
    %356 = vmatpush1.msra.mxu0 %v224
    %357 = vmatprep.subr.mxu0 %v229
    %358 = vmatpush1.msra.mxu0 %v228
    %359 = vmatprep.subr.mxu0 %v233
    %360 = vmatpush1.msra.mxu0 %v232
    %361 = vmatprep.subr.mxu0 0.0
    %362 = vmatpush1.msra.mxu0 0.0
    %363 = vmatprep.subr.mxu0 0.0
    %364 = vmatpush1.msra.mxu0 0.0
    %365 = vmatprep.subr.mxu0 0.0
    %366 = vmatpush1.msra.mxu0 0.0
    %367 = vmatprep.subr.mxu0 0.0
    %368 = vmatpush1.msra.mxu0 0.0
    %369 = vmatprep.subr.mxu0 0.0
    %370 = vmatpush1.msra.mxu0 0.0
    %371 = vmatprep.subr.mxu0 0.0
    %372 = vmatpush1.msra.mxu0 0.0
    %373 = vmatprep.subr.mxu0 0.0
    %374 = vmatpush1.msra.mxu0 0.0
    %375 = vmatprep.subr.mxu0 0.0
    %376 = vmatpush1.msra.mxu0 0.0
    %377 = vmatprep.subr.mxu0 0.0
    %378 = vmatpush1.msra.mxu0 0.0
    %379 = vmatprep.subr.mxu0 0.0
    %380 = vmatpush1.msra.mxu0 0.0
    %381 = vmatprep.subr.mxu0 0.0
    %382 = vmatpush1.msra.mxu0 0.0
    %383 = vmatprep.subr.mxu0 0.0
    %384 = vmatpush1.msra.mxu0 0.0
    %385 = vmatprep.subr.mxu0 0.0
    %386 = vmatpush1.msra.mxu0 0.0
    %387 = vmatprep.subr.mxu0 0.0
    %388 = vmatpush1.msra.mxu0 0.0
    %389 = vmatprep.subr.mxu0 0.0
    %390 = vmatpush1.msra.mxu0 0.0
    %391 = vmatprep.subr.mxu0 0.0
    %392 = vmatpush1.msra.mxu0 0.0
    %393 = vmatprep.mubr.f32.mxu0 0.0
    %394 = vmatmul.mubr.f32.gmra.mrb[0].mxu0 %v43
    %v395 = vpop.f32.mrb[0].mxu0
    %v396 = vadd.f32 %v325, %v395
    %v397 = vpop.f32.mrb[0].mxu0
    %v398 = vadd.f32 %v327, %v397
    %399 = vdwg.mxu0
    %400 = vmatprep.subr.mxu0 %v47
    %401 = vmatpush1.msra.mxu0 %v46
    %402 = vmatprep.subr.mxu0 %v51
    %403 = vmatpush1.msra.mxu0 %v50
    %404 = vmatprep.subr.mxu0 %v55
    %405 = vmatpush1.msra.mxu0 %v54
    %406 = vmatprep.subr.mxu0 %v59
    %407 = vmatpush1.msra.mxu0 %v58
    %408 = vmatprep.subr.mxu0 %v63
    %409 = vmatpush1.msra.mxu0 %v62
    %410 = vmatprep.subr.mxu0 %v67
    %411 = vmatpush1.msra.mxu0 %v66
    %412 = vmatprep.subr.mxu0 %v71
    %413 = vmatpush1.msra.mxu0 %v70
    %414 = vmatprep.subr.mxu0 %v75
    %415 = vmatpush1.msra.mxu0 %v74
    %416 = vmatprep.subr.mxu0 %v79
    %417 = vmatpush1.msra.mxu0 %v78
    %418 = vmatprep.subr.mxu0 %v83
    %419 = vmatpush1.msra.mxu0 %v82
    %420 = vmatprep.subr.mxu0 %v87
    %421 = vmatpush1.msra.mxu0 %v86
    %422 = vmatprep.subr.mxu0 %v91
    %423 = vmatpush1.msra.mxu0 %v90
    %424 = vmatprep.subr.mxu0 %v95
    %425 = vmatpush1.msra.mxu0 %v94
    %426 = vmatprep.subr.mxu0 %v99
    %427 = vmatpush1.msra.mxu0 %v98
    %428 = vmatprep.subr.mxu0 %v103
    %429 = vmatpush1.msra.mxu0 %v102
    %430 = vmatprep.subr.mxu0 %v107
    %431 = vmatpush1.msra.mxu0 %v106
    %432 = vmatprep.subr.mxu0 %v111
    %433 = vmatpush1.msra.mxu0 %v110
    %434 = vmatprep.subr.mxu0 %v115
    %435 = vmatpush1.msra.mxu0 %v114
    %436 = vmatprep.subr.mxu0 %v119
    %437 = vmatpush1.msra.mxu0 %v118
    %438 = vmatprep.subr.mxu0 %v123
    %439 = vmatpush1.msra.mxu0 %v122
    %440 = vmatprep.subr.mxu0 %v127
    %441 = vmatpush1.msra.mxu0 %v126
    %442 = vmatprep.subr.mxu0 %v131
    %443 = vmatpush1.msra.mxu0 %v130
    %444 = vmatprep.subr.mxu0 %v135
    %445 = vmatpush1.msra.mxu0 %v134
    %446 = vmatprep.subr.mxu0 %v139
    %447 = vmatpush1.msra.mxu0 %v138
    %448 = vmatprep.subr.mxu0 %v143
    %449 = vmatpush1.msra.mxu0 %v142
    %450 = vmatprep.subr.mxu0 %v147
    %451 = vmatpush1.msra.mxu0 %v146
    %452 = vmatprep.subr.mxu0 %v151
    %453 = vmatpush1.msra.mxu0 %v150
    %454 = vmatprep.subr.mxu0 %v155
    %455 = vmatpush1.msra.mxu0 %v154
    %456 = vmatprep.subr.mxu0 %v159
    %457 = vmatpush1.msra.mxu0 %v158
    %458 = vmatprep.subr.mxu0 %v163
    %459 = vmatpush1.msra.mxu0 %v162
    %460 = vmatprep.subr.mxu0 %v167
    %461 = vmatpush1.msra.mxu0 %v166
    %462 = vmatprep.subr.mxu0 %v171
    %463 = vmatpush1.msra.mxu0 %v170
    %464 = vmatprep.mubr.f32.mxu0 %v42
    %465 = vmatmul.mubr.f32.gmra.mrb[0].mxu0 %v41
    %v466 = vpop.f32.mrb[0].mxu0
    %v467 = vadd.f32 %v249, %v466
    %v468 = vpop.f32.mrb[0].mxu0
    %v469 = vadd.f32 %v253, %v468
    %470 = vdwg.mxu0
    %471 = vmatprep.subr.mxu0 %v175
    %472 = vmatpush1.msra.mxu0 %v174
    %473 = vmatprep.subr.mxu0 %v179
    %474 = vmatpush1.msra.mxu0 %v178
    %475 = vmatprep.subr.mxu0 %v183
    %476 = vmatpush1.msra.mxu0 %v182
    %477 = vmatprep.subr.mxu0 %v187
    %478 = vmatpush1.msra.mxu0 %v186
    %479 = vmatprep.subr.mxu0 %v191
    %480 = vmatpush1.msra.mxu0 %v190
    %481 = vmatprep.subr.mxu0 %v195
    %482 = vmatpush1.msra.mxu0 %v194
    %483 = vmatprep.subr.mxu0 %v199
    %484 = vmatpush1.msra.mxu0 %v198
    %485 = vmatprep.subr.mxu0 %v203
    %486 = vmatpush1.msra.mxu0 %v202
    %487 = vmatprep.subr.mxu0 %v207
    %488 = vmatpush1.msra.mxu0 %v206
    %489 = vmatprep.subr.mxu0 %v211
    %490 = vmatpush1.msra.mxu0 %v210
    %491 = vmatprep.subr.mxu0 %v215
    %492 = vmatpush1.msra.mxu0 %v214
    %493 = vmatprep.subr.mxu0 %v219
    %494 = vmatpush1.msra.mxu0 %v218
    %495 = vmatprep.subr.mxu0 %v223
    %496 = vmatpush1.msra.mxu0 %v222
    %497 = vmatprep.subr.mxu0 %v227
    %498 = vmatpush1.msra.mxu0 %v226
    %499 = vmatprep.subr.mxu0 %v231
    %500 = vmatpush1.msra.mxu0 %v230
    %501 = vmatprep.subr.mxu0 %v235
    %502 = vmatpush1.msra.mxu0 %v234
    %503 = vmatprep.subr.mxu0 0.0
    %504 = vmatpush1.msra.mxu0 0.0
    %505 = vmatprep.subr.mxu0 0.0
    %506 = vmatpush1.msra.mxu0 0.0
    %507 = vmatprep.subr.mxu0 0.0
    %508 = vmatpush1.msra.mxu0 0.0
    %509 = vmatprep.subr.mxu0 0.0
    %510 = vmatpush1.msra.mxu0 0.0
    %511 = vmatprep.subr.mxu0 0.0
    %512 = vmatpush1.msra.mxu0 0.0
    %513 = vmatprep.subr.mxu0 0.0
    %514 = vmatpush1.msra.mxu0 0.0
    %515 = vmatprep.subr.mxu0 0.0
    %516 = vmatpush1.msra.mxu0 0.0
    %517 = vmatprep.subr.mxu0 0.0
    %518 = vmatpush1.msra.mxu0 0.0
    %519 = vmatprep.subr.mxu0 0.0
    %520 = vmatpush1.msra.mxu0 0.0
    %521 = vmatprep.subr.mxu0 0.0
    %522 = vmatpush1.msra.mxu0 0.0
    %523 = vmatprep.subr.mxu0 0.0
    %524 = vmatpush1.msra.mxu0 0.0
    %525 = vmatprep.subr.mxu0 0.0
    %526 = vmatpush1.msra.mxu0 0.0
    %527 = vmatprep.subr.mxu0 0.0
    %528 = vmatpush1.msra.mxu0 0.0
    %529 = vmatprep.subr.mxu0 0.0
    %530 = vmatpush1.msra.mxu0 0.0
    %531 = vmatprep.subr.mxu0 0.0
    %532 = vmatpush1.msra.mxu0 0.0
    %533 = vmatprep.subr.mxu0 0.0
    %534 = vmatpush1.msra.mxu0 0.0
    %535 = vmatprep.mubr.f32.mxu0 0.0
    %536 = vmatmul.mubr.f32.gmra.mrb[0].mxu0 %v43
    %v537 = vpop.f32.mrb[0].mxu0
    %v538 = vadd.f32 %v467, %v537
    %v539 = vpop.f32.mrb[0].mxu0
    %v540 = vadd.f32 %v469, %v539
    %541 = vdwg.mxu0
    %542 = vst [vmem:[#allocation7] sm:$0xff] %v396
    %543 = vst [vmem:[#allocation7 + $0x8] sm:$0xff] %v398
    %544 = vst [vmem:[#allocation7 + $0x10] sm:$0xff] %v538
    %545 = vst [vmem:[#allocation7 + $0x18] sm:$0xff] %v540
    // Predicated region
    $region22: #{tpu_custom_call.1} parent=1 // pred_check
      _
    $region23: #{tpu_custom_call.1} parent=1 // pred_check_branch
      %547 = sbr.rel (0) target = $region25
    $region24: #{tpu_custom_call.1} parent=1 // pred_region
      %s549 = ssub.s32 512, 512
      %550 = vsyncadd [#allocation4], %s549
      %s552 = sshll.u32 [#allocation7], 4
      %s553 = int_to_ptr.vmem [resolvable:$true] %s552
      %555 = dma.vmem_to_hbm [thread:$0]  %s553, 512, %s3, [#allocation4]
    $region25: #{tpu_custom_call.1} parent=1 // pred_fallthru
      _
    // Predicated region
    $region26: #{tpu_custom_call.1} parent=1 // pred_check
      _
    $region27: #{tpu_custom_call.1} parent=1 // pred_check_branch
      %557 = sbr.rel (0) target = $region29
    $region28: #{tpu_custom_call.1} parent=1 // pred_region
      %558 = dma.done [#allocation4], 512
    $region29: #{tpu_custom_call.1} parent=1 // pred_fallthru
      _
    %559 = vsyncpa [#allocation3], 1
    %560 = vsyncpa [#allocation6], 1
    %561 = vsyncpa [#allocation4], 1

</llo_original>
